<compile_context>
chip_gen: v7x
topology: tpu7x:2x2x1
jax: 0.10.0
libtpu: 0.0.40
codegen_flags: <defaults>
</compile_context>

<pallas_src>
import jax
import jax.numpy as jnp
from jax.experimental import pallas as pl
from jax.experimental.pallas import tpu as pltpu


# ----------------------------------------------------------------------------
# Tiling helper
# ----------------------------------------------------------------------------

def _pick_hw_tile(hw, cap=2048):
    """Largest multiple of 128 that divides hw and is <= cap; else full hw."""
    best = None
    t = 128
    top = min(hw, cap)
    while t <= top:
        if hw % t == 0:
            best = t
        t += 128
    return best if best is not None else hw


# ----------------------------------------------------------------------------
# Pallas kernels
# ----------------------------------------------------------------------------

def _exp_clip_kernel(s_ref, o_ref):
    # o = exp(clamp(s, -20, 20)); run once per forward on param-sized data.
    o_ref[...] = jnp.exp(jnp.clip(s_ref[...], -20.0, 20.0))


def _channel_mix_kernel(x_ref, w_ref, b_ref, o_ref):
    # 1x1 conv in NCHW-flat layout.
    # x: (1, Cin, hw), w: (Cout, Cin), b: (Cout, 1) -> o: (1, Cout, hw)
    x = x_ref[0]                      # (Cin, hw)
    w = w_ref[...]                    # (Cout, Cin)
    b = b_ref[...]                    # (Cout, 1)
    cin = x.shape[0]
    if cin <= 4:
        # Contraction too small for the MXU (e.g. RGB input): unrolled VPU
        # broadcast-multiply-adds instead (op is HBM-bound anyway).
        acc = jnp.zeros((w.shape[0], x.shape[1]), jnp.float32)
        for ci in range(cin):
            acc = acc + w[:, ci:ci + 1] * x[ci:ci + 1, :]
    else:
        acc = jnp.dot(w.astype(jnp.bfloat16), x.astype(jnp.bfloat16),
                      preferred_element_type=jnp.float32)
    o_ref[...] = (acc + b)[None].astype(o_ref.dtype)


def _encode_head_kernel(hr_ref, hi_ref, m_ref, es_ref,
                        wmr_ref, wmi_ref, wsr_ref, wsi_ref,
                        bm_ref, bs_ref,
                        hmean_ref, hvar_ref, hstd_ref):
    # Fused: spectral shift/scale, the 1x1 "t" conv (deinterleaved into mean /
    # std weight halves, re/im weight halves), and the square/abs epilogue.
    # MXU does the channel mixing in bf16 (f32 accumulation); VPU work rides
    # in otherwise-idle slots.
    es = es_ref[...]                                       # (C, hw)
    re = ((hr_ref[0] - m_ref[...]) * es).astype(jnp.bfloat16)
    im = (hi_ref[0] * es).astype(jnp.bfloat16)
    mean = (jnp.dot(wmr_ref[...], re, preferred_element_type=jnp.float32)
            + jnp.dot(wmi_ref[...], im, preferred_element_type=jnp.float32)
            + bm_ref[...])
    xs = (jnp.dot(wsr_ref[...], re, preferred_element_type=jnp.float32)
          + jnp.dot(wsi_ref[...], im, preferred_element_type=jnp.float32)
          + bs_ref[...])
    hmean_ref[...] = mean[None]
    hvar_ref[...] = (xs * xs)[None]
    hstd_ref[...] = jnp.abs(xs)[None]


def _fs_stats_kernel(hmean_ref, hvar_ref, fsmean_ref, fsvar_ref):
    # Few-shot batch statistics over the (full, resident) train batch.
    hm = hmean_ref[...]                                    # (Btr, C, hw)
    hv = hvar_ref[...]
    b = hm.shape[0]
    mu = jnp.mean(hm, axis=0, keepdims=True)
    denom = float(max(b - 1, 1))   # unbiased var; guard Btr == 1 (NaN in torch)
    var_u = jnp.sum((hm - mu) ** 2, axis=0, keepdims=True) / denom
    fsmean_ref[...] = mu
    fsvar_ref[...] = jnp.mean(hv, axis=0, keepdims=True) + var_u


def _repar_kl_kernel(hmean_ref, hvar_ref, hstd_ref, fsmean_ref, fsvar_ref,
                     noise_ref, hgen_ref, kl_ref):
    eps = 1e-20
    hmean = hmean_ref[...]                                 # (Bte, C, hw)
    hvar = hvar_ref[...]
    fsmean = fsmean_ref[...]                               # (1, C, hw)
    fsvar = fsvar_ref[...]
    hgen_ref[...] = hmean + hstd_ref[...] * noise_ref[...]
    kl = (-jnp.log((hvar + eps) / (fsvar + eps)) * 0.5
          + (hvar + (hmean - fsmean) ** 2) * 0.5 / (fsvar + eps)
          - 0.5)
    kl_ref[...] = jnp.sum(kl, axis=1, keepdims=True)       # sum over channels


def _decode_scale_kernel(h_ref, m2_ref, es2_ref, re_ref, im_ref):
    # (h_gen + m2) * exp(clamp(s2)); channels are pre-permuted so the complex
    # re/im split is two CONTIGUOUS halves (no strided channel gather).
    hs = (h_ref[0] + m2_ref[...]) * es2_ref[...]           # (C, hw)
    half = hs.shape[0] // 2
    re_ref[...] = hs[:half][None]
    im_ref[...] = hs[half:][None]


# ----------------------------------------------------------------------------
# Wrappers around pallas_call
# ----------------------------------------------------------------------------

def exp_clip(s2d, hw_cap=4096):
    C, HW = s2d.shape
    hw_t = _pick_hw_tile(HW, hw_cap)
    return pl.pallas_call(
        _exp_clip_kernel,
        out_shape=jax.ShapeDtypeStruct((C, HW), jnp.float32),
        grid=(HW // hw_t,),
        in_specs=[pl.BlockSpec((C, hw_t), lambda t: (0, t))],
        out_specs=pl.BlockSpec((C, hw_t), lambda t: (0, t)),
        compiler_params=pltpu.CompilerParams(
            dimension_semantics=("parallel",)),
    )(s2d)


def channel_mix(x_bchw, w, b, hw_cap=2048):
    """1x1 conv: out[b, co, p] = sum_ci w[co, ci] * x[b, ci, p] + b[co]."""
    B, Cin, H, W = x_bchw.shape
    Cout = w.shape[0]
    HW = H * W
    hw_t = _pick_hw_tile(HW, hw_cap)
    out3 = pl.pallas_call(
        _channel_mix_kernel,
        out_shape=jax.ShapeDtypeStruct((B, Cout, HW), jnp.float32),
        grid=(B, HW // hw_t),
        in_specs=[
            pl.BlockSpec((1, Cin, hw_t), lambda bi, ti: (bi, 0, ti)),
            pl.BlockSpec((Cout, Cin), lambda bi, ti: (0, 0)),
            pl.BlockSpec((Cout, 1), lambda bi, ti: (0, 0)),
        ],
        out_specs=pl.BlockSpec((1, Cout, hw_t), lambda bi, ti: (bi, 0, ti)),
        compiler_params=pltpu.CompilerParams(
            dimension_semantics=("parallel", "parallel")),
    )(x_bchw.reshape(B, Cin, HW), w, b.reshape(Cout, 1))
    return out3.reshape(B, Cout, H, W)


def prepare_params(p, nh):
    """One-time rearrangement of torch-layout params into kernel layout.

    The t-conv weight is deinterleaved (even rows -> mean, odd rows -> std) and
    its output channels are permuted to [0,2,4,...,1,3,5,...] so that decode's
    re/im split becomes two contiguous halves.  m2/s2 get the same permutation.
    The final forward outputs are numerically identical to the torch ordering.
    """
    C = 2 * nh
    H, W = p["m"].shape[-2], p["m"].shape[-1]
    HW = H * W
    perm = jnp.concatenate([jnp.arange(0, C, 2), jnp.arange(1, C, 2)])
    t_w, t_b = p["t_w"], p["t_b"]
    w_mean = t_w[0::2][perm]                               # (2nh, 4nh)
    w_std = t_w[1::2][perm]
    kp = {
        "enc_w": p["enc_w"], "enc_b": p["enc_b"],
        "dec_w": p["dec_w"], "dec_b": p["dec_b"],
        "t_w_mean_re": w_mean[:, :C].astype(jnp.bfloat16),
        "t_w_mean_im": w_mean[:, C:].astype(jnp.bfloat16),
        "t_w_std_re": w_std[:, :C].astype(jnp.bfloat16),
        "t_w_std_im": w_std[:, C:].astype(jnp.bfloat16),
        "t_b_mean": t_b[0::2][perm].reshape(C, 1),
        "t_b_std": t_b[1::2][perm].reshape(C, 1),
        "m": p["m"].reshape(C, HW),
        "es": exp_clip(p["s"].reshape(C, HW)),             # exp(clamp(s)) once
        "m2": p["m2"][0][perm].reshape(C, HW),
        "es2": exp_clip(p["s2"][0][perm].reshape(C, HW)),  # exp(clamp(s2)) once
    }
    return kp


def encode(v, kp):
    # TODO(synk): stand-in for smp.Unet(resnet18, in=3, classes=2*nh).
    h = channel_mix(v, kp["enc_w"], kp["enc_b"])           # (B, 2nh, H, W)
    B, C, H, W = h.shape
    HW = H * W
    # torch.fft.fft2 has no Pallas equivalent; plain JAX over last two axes.
    hc = jnp.fft.fft2(h)
    hr = jnp.real(hc).reshape(B, C, HW).astype(jnp.float32)
    hi = jnp.imag(hc).reshape(B, C, HW).astype(jnp.float32)
    hw_t = _pick_hw_tile(HW, 2048)
    os = jax.ShapeDtypeStruct((B, C, HW), jnp.float32)
    act_spec = pl.BlockSpec((1, C, hw_t), lambda bi, ti: (bi, 0, ti))
    par_spec = pl.BlockSpec((C, hw_t), lambda bi, ti: (0, ti))
    w_spec = pl.BlockSpec((C, C), lambda bi, ti: (0, 0))
    b_spec = pl.BlockSpec((C, 1), lambda bi, ti: (0, 0))
    hmean3, hvar3, hstd3 = pl.pallas_call(
        _encode_head_kernel,
        out_shape=(os, os, os),
        grid=(B, HW // hw_t),
        in_specs=[act_spec, act_spec, par_spec, par_spec,
                  w_spec, w_spec, w_spec, w_spec, b_spec, b_spec],
        out_specs=(act_spec, act_spec, act_spec),
        compiler_params=pltpu.CompilerParams(
            dimension_semantics=("parallel", "parallel")),
    )(hr, hi, kp["m"], kp["es"],
      kp["t_w_mean_re"], kp["t_w_mean_im"], kp["t_w_std_re"], kp["t_w_std_im"],
      kp["t_b_mean"], kp["t_b_std"])
    return (hmean3.reshape(B, C, H, W), hvar3.reshape(B, C, H, W),
            hstd3.reshape(B, C, H, W))


def decode(h_gen, kp):
    B, C, H, W = h_gen.shape                               # C = 2*nh
    nh = C // 2
    HW = H * W
    hw_t = _pick_hw_tile(HW, 2048)
    re3, im3 = pl.pallas_call(
        _decode_scale_kernel,
        out_shape=(jax.ShapeDtypeStruct((B, nh, HW), jnp.float32),
                   jax.ShapeDtypeStruct((B, nh, HW), jnp.float32)),
        grid=(B, HW // hw_t),
        in_specs=[
            pl.BlockSpec((1, C, hw_t), lambda bi, ti: (bi, 0, ti)),
            pl.BlockSpec((C, hw_t), lambda bi, ti: (0, ti)),
            pl.BlockSpec((C, hw_t), lambda bi, ti: (0, ti)),
        ],
        out_specs=(pl.BlockSpec((1, nh, hw_t), lambda bi, ti: (bi, 0, ti)),
                   pl.BlockSpec((1, nh, hw_t), lambda bi, ti: (bi, 0, ti))),
        compiler_params=pltpu.CompilerParams(
            dimension_semantics=("parallel", "parallel")),
    )(h_gen.reshape(B, C, HW), kp["m2"], kp["es2"])
    # torch.fft.ifft2 has no Pallas equivalent; plain JAX over last two axes.
    hc = jax.lax.complex(re3.reshape(B, nh, H, W), im3.reshape(B, nh, H, W))
    hreal = jnp.real(jnp.fft.ifft2(hc)).astype(jnp.float32)
    # TODO(synk): stand-in for smp.Unet(resnet18, in=nh, classes=3).
    return channel_mix(hreal, kp["dec_w"], kp["dec_b"])


def forward(vtrain, vtest, params, noise_key, nh):
    kp = prepare_params(params, nh)
    hmean_tr, hvar_tr, _ = encode(vtrain, kp)
    hmean_te, hvar_te, hstd_te = encode(vtest, kp)

    Btr, C, H, W = hmean_tr.shape
    Bte = hmean_te.shape[0]
    HW = H * W
    # Keep (num_refs * block_bytes * 2 buffers) well under ~32 MiB (v7x-safe).
    hw_cap = max(128, (2 << 20) // (max(Btr, Bte) * C * 4))
    hw_t = _pick_hw_tile(HW, hw_cap)

    fsmean3, fsvar3 = pl.pallas_call(
        _fs_stats_kernel,
        out_shape=(jax.ShapeDtypeStruct((1, C, HW), jnp.float32),) * 2,
        grid=(HW // hw_t,),
        in_specs=[pl.BlockSpec((Btr, C, hw_t), lambda t: (0, 0, t))] * 2,
        out_specs=(pl.BlockSpec((1, C, hw_t), lambda t: (0, 0, t)),) * 2,
        compiler_params=pltpu.CompilerParams(
            dimension_semantics=("parallel",)),
    )(hmean_tr.reshape(Btr, C, HW), hvar_tr.reshape(Btr, C, HW))

    noise = jax.random.normal(noise_key, (Bte, C, HW), dtype=jnp.float32)

    te_spec = pl.BlockSpec((Bte, C, hw_t), lambda t: (0, 0, t))
    fs_spec = pl.BlockSpec((1, C, hw_t), lambda t: (0, 0, t))
    hgen3, kl3 = pl.pallas_call(
        _repar_kl_kernel,
        out_shape=(jax.ShapeDtypeStruct((Bte, C, HW), jnp.float32),
                   jax.ShapeDtypeStruct((Bte, 1, HW), jnp.float32)),
        grid=(HW // hw_t,),
        in_specs=[te_spec, te_spec, te_spec, fs_spec, fs_spec, te_spec],
        out_specs=(te_spec, pl.BlockSpec((Bte, 1, hw_t), lambda t: (0, 0, t))),
        compiler_params=pltpu.CompilerParams(
            dimension_semantics=("parallel",)),
    )(hmean_te.reshape(Bte, C, HW), hvar_te.reshape(Bte, C, HW),
      hstd_te.reshape(Bte, C, HW), fsmean3, fsvar3, noise)

    recon_test = decode(hgen3.reshape(Bte, C, H, W), kp)   # "recon" in torch src
    kl = kl3.reshape(Bte, 1, H, W)
    return recon_test, kl


# ----------------------------------------------------------------------------
# Deterministic parameter construction (mirrors __init__ shapes, torch layout)
# ----------------------------------------------------------------------------

def init_params(key, nh, imsz):
    ks = jax.random.split(key, 6)
    return {
        # encoder / decoder stand-ins, conv weights in (Cout, Cin) layout
        "enc_w": 0.1 * jax.random.normal(ks[0], (2 * nh, 3), jnp.float32),
        "enc_b": 0.1 * jax.random.normal(ks[1], (2 * nh,), jnp.float32),
        "dec_w": 0.1 * jax.random.normal(ks[2], (3, nh), jnp.float32),
        "dec_b": 0.1 * jax.random.normal(ks[3], (3,), jnp.float32),
        # self.t = nn.Conv2d(4*nh, 4*nh, 1)
        "t_w": 0.1 * jax.random.normal(ks[4], (4 * nh, 4 * nh), jnp.float32),
        "t_b": 0.1 * jax.random.normal(ks[5], (4 * nh,), jnp.float32),
        # spectral shift/scale parameters, zero-initialized (fill_(0))
        "m": jnp.zeros((1, 2 * nh, imsz, imsz), jnp.float32),
        "s": jnp.zeros((1, 2 * nh, imsz, imsz), jnp.float32),
        "m2": jnp.zeros((1, 2 * nh, imsz, imsz), jnp.float32),
        "s2": jnp.zeros((1, 2 * nh, imsz, imsz), jnp.float32),
    }


if __name__ == "__main__":
    nh = 4          # small nh (module default 64)
    imsz = 16       # small spatial size (module default 224)
    Btr, Bte = 2, 2

    root = jax.random.PRNGKey(0)
    k_par, k_tr, k_te, k_noise = jax.random.split(root, 4)

    params = init_params(k_par, nh, imsz)
    vtrain = jax.random.normal(k_tr, (Btr, 3, imsz, imsz), jnp.float32)
    vtest = jax.random.normal(k_te, (Bte, 3, imsz, imsz), jnp.float32)

    recon, kl = forward(vtrain, vtest, params, k_noise, nh)
    jax.block_until_ready((recon, kl))

    assert recon.shape == (Bte, 3, imsz, imsz), recon.shape
    assert kl.shape == (Bte, 1, imsz, imsz), kl.shape
    assert bool(jnp.all(jnp.isfinite(recon))) and bool(jnp.all(jnp.isfinite(kl)))
    print("KERNEL_OK")
</pallas_src>

<mosaic_0001>
module attributes {stable_mosaic.version = 11 : i64} {
  func.func @_exp_clip_kernel(%arg0: i32, %arg1: memref<8x256xf32, #tpu.memory_space<vmem>>, %arg2: memref<8x256xf32, #tpu.memory_space<vmem>>) attributes {dimension_semantics = [#tpu.dimension_semantics<parallel>], iteration_bounds = array<i64: 1>, scalar_prefetch = 0 : i64, scratch_operands = 0 : i64, tpu.core_type = #tpu.core_type<tc>, window_params = [{transform_indices = @transform_0, window_bounds = array<i64: 8, 256>}, {transform_indices = @transform_1, window_bounds = array<i64: 8, 256>}]} {
    %c0 = arith.constant 0 : index
    %c0_0 = arith.constant 0 : index
    %0 = vector.load %arg1[%c0, %c0_0] : memref<8x256xf32, #tpu.memory_space<vmem>>, vector<8x256xf32>
    %cst = arith.constant -2.000000e+01 : f32
    %cst_1 = arith.constant 2.000000e+01 : f32
    %1 = vector.broadcast %cst : f32 to vector<8x256xf32>
    %2 = arith.maximumf %1, %0 : vector<8x256xf32>
    %3 = vector.broadcast %cst_1 : f32 to vector<8x256xf32>
    %4 = arith.minimumf %3, %2 : vector<8x256xf32>
    %5 = math.exp %4 : vector<8x256xf32>
    %c0_2 = arith.constant 0 : index
    %c0_3 = arith.constant 0 : index
    %6 = vector.load %arg2[%c0_2, %c0_3] : memref<8x256xf32, #tpu.memory_space<vmem>>, vector<8x256xf32>
    tpu.vector_store %arg2[%c0_2, %c0_3], %5 {strides = array<i32>} : memref<8x256xf32, #tpu.memory_space<vmem>>, vector<8x256xf32>,
    return
  }
  func.func @transform_0(%arg0: i32) -> (i32, i32) {
    %c0_i32 = arith.constant 0 : i32
    %c0_i32_0 = arith.constant 0 : i32
    return %c0_i32, %arg0 : i32, i32
  }
  func.func @transform_1(%arg0: i32) -> (i32, i32) {
    %c0_i32 = arith.constant 0 : i32
    %c0_i32_0 = arith.constant 0 : i32
    return %c0_i32, %arg0 : i32, i32
  }
}

</mosaic_0001>

<llo_original>
// kernel: tpu_custom_call.1
$region0: #{tpu_custom_call.1}
  #allocation0 [shape = 'u32[]', space=smem, size = 0x4, offset = 0x4, fixed_abs, tag = 'smem constant byte address 0x4 - core index']
  #allocation1 [shape = 'u32[144,128]{1,0:T(1,128)}', space=vmem, size = 0x12000, scoped, tag = 'internal scratch']
  %s0 = inlined_call_operand.hbm [shape: f32[8,256], index: 0, kind: input, shape index: {}]
  %s1 = inlined_call_operand.hbm [shape: f32[8,256], index: 1, kind: output, shape index: {}]
  %s2 = sld [smem:[#allocation0]]
  $region18: #{tpu_custom_call.1} parent=0
    _
  %s4 = ssub.s32 1, %s2
  %s5 = scalar_select 0, %s4, %s2
  $region1: #{tpu_custom_call.1} parent=0
    #allocation2 [shape = 'u8[8192]{0}', space=vmem, size = 0x2000, scoped, tag = 'input window, operand 0, single buffered']
    #allocation3 [shape = 's32[1]{0}', space=sflag, size = 0x4, scoped, tag = 'scoped memory for tpu_custom_call.1']
    #allocation4 [shape = 's32[1]{0}', space=sflag, size = 0x4, scoped, tag = 'scoped memory for tpu_custom_call.1']
    #allocation5 [shape = 'u8[8192]{0}', space=vmem, size = 0x2000, scoped, tag = 'output window, operand 0, single buffered']
    %6 = vsyncpa [#allocation3], 0
    %7 = vsyncpa [#allocation4], 0
    // Predicated region
    $region2: #{tpu_custom_call.1} parent=1 // pred_check
      _
    $region3: #{tpu_custom_call.1} parent=1 // pred_check_branch
      %9 = sbr.rel (0) target = $region5
    $region4: #{tpu_custom_call.1} parent=1 // pred_region
      %s11 = ssub.s32 256, 256
      %12 = vsyncadd [#allocation3], %s11
      %s14 = sshll.u32 [#allocation2], 4
      %s15 = int_to_ptr.vmem [resolvable:$true] %s14
      %17 = dma.hbm_to_vmem [thread:$0]  %s0, 256, %s15, [#allocation3]
    $region5: #{tpu_custom_call.1} parent=1 // pred_fallthru
      _
    // Predicated region
    $region6: #{tpu_custom_call.1} parent=1 // pred_check
      _
    $region7: #{tpu_custom_call.1} parent=1 // pred_check_branch
      %19 = sbr.rel (0) target = $region9
    $region8: #{tpu_custom_call.1} parent=1 // pred_region
      %20 = dma.done [#allocation3], 256
    $region9: #{tpu_custom_call.1} parent=1 // pred_fallthru
      _
    %v21 = vld [vmem:[#allocation2] sm:$0xff]
    %v22 = vld [vmem:[#allocation2 + $0x8] sm:$0xff]
    %v23 = vmax.f32 %v21, -20.0
    %v24 = vmax.f32 %v22, -20.0
    %v25 = vmin.f32 %v23, 20.0
    %v26 = vmin.f32 %v24, 20.0
    %v27 = vmul.f32 %v25, 1.442695
    %v28 = vpow.pop %v27
    %v29 = vmul.f32 %v26, 1.442695
    %v30 = vpow.pop %v29
    %31 = vst [vmem:[#allocation5] sm:$0xff] %v28
    %32 = vst [vmem:[#allocation5 + $0x8] sm:$0xff] %v30
    // Predicated region
    $region10: #{tpu_custom_call.1} parent=1 // pred_check
      _
    $region11: #{tpu_custom_call.1} parent=1 // pred_check_branch
      %34 = sbr.rel (0) target = $region13
    $region12: #{tpu_custom_call.1} parent=1 // pred_region
      %s36 = ssub.s32 256, 256
      %37 = vsyncadd [#allocation4], %s36
      %s39 = sshll.u32 [#allocation5], 4
      %s40 = int_to_ptr.vmem [resolvable:$true] %s39
      %42 = dma.vmem_to_hbm [thread:$0]  %s40, 256, %s1, [#allocation4]
    $region13: #{tpu_custom_call.1} parent=1 // pred_fallthru
      _
    // Predicated region
    $region14: #{tpu_custom_call.1} parent=1 // pred_check
      _
    $region15: #{tpu_custom_call.1} parent=1 // pred_check_branch
      %44 = sbr.rel (0) target = $region17
    $region16: #{tpu_custom_call.1} parent=1 // pred_region
      %45 = dma.done [#allocation4], 256
    $region17: #{tpu_custom_call.1} parent=1 // pred_fallthru
      _
    %46 = vsyncpa [#allocation3], 1
    %47 = vsyncpa [#allocation4], 1

</llo_original>
